<compile_context>
chip_gen: v7x
topology: tpu7x:2x2x1
jax: 0.10.0
libtpu: 0.0.40
codegen_flags: <defaults>
</compile_context>

<pallas_src>
import math
import functools

import jax
import jax.numpy as jnp
from jax.experimental import pallas as pl
from jax.experimental.pallas import tpu as pltpu


# ---------------------------------------------------------------------------
# Buffer construction -- mirrors FixedPositionalEncoding.__init__ (done once).
# ---------------------------------------------------------------------------
def build_pe(d_model: int, max_len: int = 1024, scale_factor: float = 1.0,
             dtype=jnp.float32):
    position = jnp.arange(0, max_len, dtype=jnp.float32)[:, None]          # (L, 1)
    div_term = jnp.exp(jnp.arange(0, d_model, 2, dtype=jnp.float32)
                       * (-math.log(10000.0) / d_model))                   # (D/2,)
    pe = jnp.zeros((max_len, d_model), dtype=jnp.float32)
    pe = pe.at[:, 0::2].set(jnp.sin(position * div_term))
    pe = pe.at[:, 1::2].set(jnp.cos(position * div_term))
    # torch: pe.unsqueeze(0).transpose(0, 1) -> (max_len, 1, d_model)
    pe = scale_factor * pe[:, None, :]
    return pe.astype(dtype)


# ---------------------------------------------------------------------------
# Helpers
# ---------------------------------------------------------------------------
def _lane_tile(t, reps: int):
    """Replicate a 2-D tile `reps` times along the last (lane) axis.

    All copies are identical, so a log-doubling concatenation is used to keep
    the number of concat ops at O(log reps).
    """
    if reps <= 1:
        return t
    parts = []
    cur, r = t, reps
    while r > 0:
        if r & 1:
            parts.append(cur)
        r >>= 1
        if r:
            cur = jnp.concatenate([cur, cur], axis=-1)
    return parts[0] if len(parts) == 1 else jnp.concatenate(parts, axis=-1)


# ---------------------------------------------------------------------------
# Pallas kernel: y = dropout(x + pe)
#   x_ref : (ts, B*D)          lane-dense block of the (folded) input
#   pe_ref: (ts, D) or (ts, B*D)  positional-encoding block
# ---------------------------------------------------------------------------
def _pe_kernel(seed_ref, x_ref, pe_ref, o_ref, *, lane_reps: int,
               dropout_p: float, train: bool):
    pe_t = pe_ref[...]
    if lane_reps > 1:
        # Replicate the (ts, D) pe tile across the batch copies that live on
        # the lane axis (only taken when D % 128 == 0 -> aligned concat).
        pe_t = _lane_tile(pe_t, lane_reps)

    y = x_ref[...] + pe_t

    if train and dropout_p > 0.0:
        keep = 1.0 - dropout_p
        # Integer-threshold dropout: keep iff bits < keep * 2^32.
        thresh = jnp.uint32(min(int(keep * 4294967296.0), 4294967295))
        # Per-tile reseed so each grid step draws independent randomness.
        pltpu.prng_seed(seed_ref[0] + pl.program_id(0))
        bits = pltpu.prng_random_bits(y.shape)
        if bits.dtype != jnp.uint32:            # bit-preserving, no-op if already u32
            bits = pltpu.bitcast(bits, jnp.uint32)
        y = jnp.where(bits < thresh, y * (1.0 / keep), jnp.zeros_like(y))

    o_ref[...] = y.astype(o_ref.dtype)


# ---------------------------------------------------------------------------
# Wrapper
# ---------------------------------------------------------------------------
def fixed_positional_encoding(x, pe, *, dropout_p: float = 0.1,
                              train: bool = False, seed: int = 0,
                              target_block_bytes: int = 4 * 1024 * 1024):
    """x: (S, B, D);  pe: (max_len, 1, D).  Returns dropout(x + pe[:S])."""
    S, B, D = x.shape
    assert pe.shape[0] >= S and pe.shape[-1] == D

    # Free, layout-only reshapes: fold (batch, d_model) onto the lane axis.
    x2 = x.reshape(S, B * D)
    pe2 = pe[:S].reshape(S, D)

    # Sequence tile: largest multiple-of-8 row count whose x block is about
    # `target_block_bytes`, capped at S (full extent is always legal).
    row_bytes = int(B) * int(D) * int(jnp.dtype(x.dtype).itemsize)
    ts = max(8, (int(target_block_bytes) // max(row_bytes, 1)) // 8 * 8)
    if ts >= S:
        ts = S
    grid = (pl.cdiv(S, ts),)

    # pe handling: in-kernel lane replication when D is lane-aligned, otherwise
    # pre-tile once on the host so the kernel's output stays one lane-dense slab.
    if B > 1 and D % 128 == 0:
        pe_in, pe_cols, lane_reps = pe2, D, B
    elif B > 1:
        pe_in, pe_cols, lane_reps = jnp.tile(pe2, (1, B)), B * D, 1
    else:
        pe_in, pe_cols, lane_reps = pe2, D, 1

    # Explicit VMEM budget: double-buffered x-in + out + pe-in, clamped so it is
    # valid on v5e/v6e (128 MiB) and v7x (64 MiB physical).
    x_block_bytes = ts * row_bytes
    pe_block_bytes = ts * pe_cols * int(jnp.dtype(pe_in.dtype).itemsize)
    vmem_need = 2 * (2 * x_block_bytes + pe_block_bytes) + (2 << 20)
    vmem_limit = int(min(max(vmem_need, 32 * 1024 * 1024), 48 * 1024 * 1024))

    kernel = functools.partial(_pe_kernel, lane_reps=lane_reps,
                               dropout_p=float(dropout_p), train=bool(train))
    seed_arr = jnp.asarray([seed], dtype=jnp.int32)

    out2 = pl.pallas_call(
        kernel,
        out_shape=jax.ShapeDtypeStruct((S, B * D), x.dtype),
        grid_spec=pltpu.PrefetchScalarGridSpec(
            num_scalar_prefetch=1,
            grid=grid,
            in_specs=[
                pl.BlockSpec((ts, B * D), lambda i, s_ref: (i, 0)),
                pl.BlockSpec((ts, pe_cols), lambda i, s_ref: (i, 0)),
            ],
            out_specs=pl.BlockSpec((ts, B * D), lambda i, s_ref: (i, 0)),
        ),
        compiler_params=pltpu.CompilerParams(
            dimension_semantics=("parallel",),
            vmem_limit_bytes=vmem_limit),
    )(seed_arr, x2, pe_in)

    return out2.reshape(S, B, D)


# ---------------------------------------------------------------------------
# Demo / self-check
# ---------------------------------------------------------------------------
if __name__ == "__main__":
    key = jax.random.PRNGKey(0)

    # small shapes consistent with the module: [seq, batch, d_model]
    S, B, D = 8, 2, 32
    max_len = 64

    x = jax.random.normal(key, (S, B, D), dtype=jnp.float32)
    pe = build_pe(D, max_len=max_len, scale_factor=1.0)

    # eval mode (dropout is identity) -- deterministic and checkable.
    # Training-mode dropout uses the TPU hardware PRNG and therefore only runs
    # on a real TPU backend, so it is not exercised here.
    out = fixed_positional_encoding(x, pe, dropout_p=0.1, train=False)
    out = jax.block_until_ready(out)

    ref = x + pe[:S]          # pure-JAX reference for the eval path
    assert out.shape == (S, B, D)
    assert jnp.allclose(out, ref, atol=1e-6), "mismatch vs reference"

    print("KERNEL_OK")
</pallas_src>

<mosaic_0001>
module attributes {stable_mosaic.version = 11 : i64} {
  func.func @_pe_kernel(%arg0: i32, %arg1: memref<1xi32, #tpu.memory_space<smem>>, %arg2: memref<8x64xf32, #tpu.memory_space<vmem>>, %arg3: memref<8x64xf32, #tpu.memory_space<vmem>>, %arg4: memref<8x64xf32, #tpu.memory_space<vmem>>) attributes {dimension_semantics = [#tpu.dimension_semantics<parallel>], iteration_bounds = array<i64: 1>, scalar_prefetch = 1 : i64, scratch_operands = 0 : i64, tpu.core_type = #tpu.core_type<tc>, window_params = [{transform_indices = @transform_0, window_bounds = array<i64: 8, 64>}, {transform_indices = @transform_1, window_bounds = array<i64: 8, 64>}, {transform_indices = @transform_2, window_bounds = array<i64: 8, 64>}]} {
    %c0 = arith.constant 0 : index
    %c0_0 = arith.constant 0 : index
    %0 = vector.load %arg3[%c0, %c0_0] : memref<8x64xf32, #tpu.memory_space<vmem>>, vector<8x64xf32>
    %c0_1 = arith.constant 0 : index
    %c0_2 = arith.constant 0 : index
    %1 = vector.load %arg2[%c0_1, %c0_2] : memref<8x64xf32, #tpu.memory_space<vmem>>, vector<8x64xf32>
    %2 = arith.addf %1, %0 : vector<8x64xf32>
    %c0_3 = arith.constant 0 : index
    %c0_4 = arith.constant 0 : index
    %3 = vector.load %arg4[%c0_3, %c0_4] : memref<8x64xf32, #tpu.memory_space<vmem>>, vector<8x64xf32>
    tpu.vector_store %arg4[%c0_3, %c0_4], %2 {strides = array<i32>} : memref<8x64xf32, #tpu.memory_space<vmem>>, vector<8x64xf32>,
    return
  }
  func.func @transform_0(%arg0: i32, %arg1: memref<1xi32, #tpu.memory_space<smem>>) -> (i32, i32) {
    %c0_i32 = arith.constant 0 : i32
    %c0_i32_0 = arith.constant 0 : i32
    return %arg0, %c0_i32 : i32, i32
  }
  func.func @transform_1(%arg0: i32, %arg1: memref<1xi32, #tpu.memory_space<smem>>) -> (i32, i32) {
    %c0_i32 = arith.constant 0 : i32
    %c0_i32_0 = arith.constant 0 : i32
    return %arg0, %c0_i32 : i32, i32
  }
  func.func @transform_2(%arg0: i32, %arg1: memref<1xi32, #tpu.memory_space<smem>>) -> (i32, i32) {
    %c0_i32 = arith.constant 0 : i32
    %c0_i32_0 = arith.constant 0 : i32
    return %arg0, %c0_i32 : i32, i32
  }
}

</mosaic_0001>

<llo_original>
// kernel: tpu_custom_call.1
$region0: #{tpu_custom_call.1}
  #allocation0 [shape = 'u32[]', space=smem, size = 0x4, offset = 0x4, fixed_abs, tag = 'smem constant byte address 0x4 - core index']
  #allocation1 [shape = 'u32[144,128]{1,0:T(1,128)}', space=vmem, size = 0x12000, scoped, tag = 'internal scratch']
  #allocation2 [shape = 's32[1]{0}', space=sflag, size = 0x4, scoped, tag = 'scoped memory for tpu_custom_call.1']
  #allocation3 [shape = 's32[1]{0:T(128)S(6)}', space=smem, size = 0x200, scoped, tag = 'prefetched SMEM operand 0']
  %s0 = inlined_call_operand.<no memory space> [shape: s32[1], index: 0, kind: input, shape index: {}]
  %s1 = inlined_call_operand.hbm [shape: f32[8,64], index: 1, kind: input, shape index: {}]
  %s2 = inlined_call_operand.hbm [shape: f32[8,64], index: 2, kind: input, shape index: {}]
  %s3 = inlined_call_operand.hbm [shape: f32[8,64], index: 3, kind: output, shape index: {}]
  %s4 = sld [smem:[#allocation0]]
  $region26: #{tpu_custom_call.1} parent=0
    _
  %s6 = ssub.s32 1, %s4
  %s7 = scalar_select 0, %s6, %s4
  %8 = sst [smem:[#allocation3]] %s0
  $region1: #{tpu_custom_call.1} parent=0
    #allocation4 [shape = 'u8[4096]{0}', space=vmem, size = 0x1000, scoped, tag = 'input window, operand 1, single buffered']
    #allocation5 [shape = 's32[1]{0}', space=sflag, size = 0x4, scoped, tag = 'scoped memory for tpu_custom_call.1']
    #allocation6 [shape = 's32[1]{0}', space=sflag, size = 0x4, scoped, tag = 'scoped memory for tpu_custom_call.1']
    #allocation7 [shape = 'u8[4096]{0}', space=vmem, size = 0x1000, scoped, tag = 'input window, operand 2, single buffered']
    #allocation8 [shape = 's32[1]{0}', space=sflag, size = 0x4, scoped, tag = 'scoped memory for tpu_custom_call.1']
    #allocation9 [shape = 'u8[4096]{0}', space=vmem, size = 0x1000, scoped, tag = 'output window, operand 0, single buffered']
    %9 = vsyncpa [#allocation5], 0
    %10 = vsyncpa [#allocation8], 0
    %11 = vsyncpa [#allocation6], 0
    // Predicated region
    $region2: #{tpu_custom_call.1} parent=1 // pred_check
      _
    $region3: #{tpu_custom_call.1} parent=1 // pred_check_branch
      %13 = sbr.rel (0) target = $region5
    $region4: #{tpu_custom_call.1} parent=1 // pred_region
      %s15 = ssub.s32 128, 128
      %16 = vsyncadd [#allocation5], %s15
      %s18 = sshll.u32 [#allocation4], 4
      %s19 = int_to_ptr.vmem [resolvable:$true] %s18
      %21 = dma.hbm_to_vmem [thread:$0]  %s1, 128, %s19, [#allocation5]
    $region5: #{tpu_custom_call.1} parent=1 // pred_fallthru
      _
    // Predicated region
    $region6: #{tpu_custom_call.1} parent=1 // pred_check
      _
    $region7: #{tpu_custom_call.1} parent=1 // pred_check_branch
      %23 = sbr.rel (0) target = $region9
    $region8: #{tpu_custom_call.1} parent=1 // pred_region
      %s25 = ssub.s32 128, 128
      %26 = vsyncadd [#allocation8], %s25
      %s28 = sshll.u32 [#allocation7], 4
      %s29 = int_to_ptr.vmem [resolvable:$true] %s28
      %31 = dma.hbm_to_vmem [thread:$0]  %s2, 128, %s29, [#allocation8]
    $region9: #{tpu_custom_call.1} parent=1 // pred_fallthru
      _
    // Predicated region
    $region10: #{tpu_custom_call.1} parent=1 // pred_check
      _
    $region11: #{tpu_custom_call.1} parent=1 // pred_check_branch
      %33 = sbr.rel (0) target = $region13
    $region12: #{tpu_custom_call.1} parent=1 // pred_region
      %34 = dma.done [#allocation5], 128
    $region13: #{tpu_custom_call.1} parent=1 // pred_fallthru
      _
    // Predicated region
    $region14: #{tpu_custom_call.1} parent=1 // pred_check
      _
    $region15: #{tpu_custom_call.1} parent=1 // pred_check_branch
      %36 = sbr.rel (0) target = $region17
    $region16: #{tpu_custom_call.1} parent=1 // pred_region
      %37 = dma.done [#allocation8], 128
    $region17: #{tpu_custom_call.1} parent=1 // pred_fallthru
      _
    %v38 = vld [vmem:[#allocation7] sm:$0xff]
    %v39 = vld [vmem:[#allocation4] sm:$0xff]
    %v40 = vadd.f32 %v39, %v38
    %vm41 = vcmask 523264
    %42 = vst.msk [vmem:[#allocation9] sm:$0xff] %vm41, %v40
    // Predicated region
    $region18: #{tpu_custom_call.1} parent=1 // pred_check
      _
    $region19: #{tpu_custom_call.1} parent=1 // pred_check_branch
      %44 = sbr.rel (0) target = $region21
    $region20: #{tpu_custom_call.1} parent=1 // pred_region
      %s46 = ssub.s32 128, 128
      %47 = vsyncadd [#allocation6], %s46
      %s49 = sshll.u32 [#allocation9], 4
      %s50 = int_to_ptr.vmem [resolvable:$true] %s49
      %52 = dma.vmem_to_hbm [thread:$0]  %s50, 128, %s3, [#allocation6]
    $region21: #{tpu_custom_call.1} parent=1 // pred_fallthru
      _
    // Predicated region
    $region22: #{tpu_custom_call.1} parent=1 // pred_check
      _
    $region23: #{tpu_custom_call.1} parent=1 // pred_check_branch
      %54 = sbr.rel (0) target = $region25
    $region24: #{tpu_custom_call.1} parent=1 // pred_region
      %55 = dma.done [#allocation6], 128
    $region25: #{tpu_custom_call.1} parent=1 // pred_fallthru
      _
    %56 = vsyncpa [#allocation5], 1
    %57 = vsyncpa [#allocation8], 1
    %58 = vsyncpa [#allocation6], 1

</llo_original>
